<compile_context>
chip_gen: v7x
topology: tpu7x:2x2x1
jax: 0.10.0
libtpu: 0.0.40
codegen_flags: <defaults>
</compile_context>

<pallas_src>
from functools import partial

import numpy as np
import jax
import jax.numpy as jnp
from jax.experimental import pallas as pl
from jax.experimental.pallas import tpu as pltpu


def _round_up(n, m):
    return (n + m - 1) // m * m


def _softplus_torch(x):
    # torch.nn.Softplus(beta=1, threshold=20)
    return jnp.where(x > 20.0, x, jnp.log1p(jnp.exp(jnp.minimum(x, 20.0))))


def _quantile_mlp_kernel(x_ref, w1_ref, b1_ref, w2_ref, b2_ref,
                         sel_first_ref, sel_cum_ref, out_ref):
    # hidden = relu(x @ W1 + b1)                       (MXU + VPU)
    h = jnp.dot(x_ref[...], w1_ref[...], preferred_element_type=jnp.float32)
    h = jnp.maximum(h + b1_ref[...], 0.0)
    # fout = h @ W2 + b2   -> (TB, MQ), real columns only   (MXU)
    fout = jnp.dot(h, w2_ref[...], preferred_element_type=jnp.float32) + b2_ref[...]
    # softplus on the real MQ columns only              (EUP)
    sp = _softplus_torch(fout)
    # Monotone quantile head as two accumulating selector matmuls:
    #   out[:, m*Q + q] = fout[:, m*Q] + sum_{k=1..q} softplus(fout[:, m*Q+k])
    out = jnp.dot(fout, sel_first_ref[...], preferred_element_type=jnp.float32)
    out = out + jnp.dot(sp, sel_cum_ref[...], preferred_element_type=jnp.float32)
    out_ref[...] = out.astype(out_ref.dtype)


def _make_selectors(y_dim, n_out):
    """Two constant (MQ, MQ) selectors.
    sel_first[i, j] = 1 iff i is the leader column of j's group (applied to fout)
    sel_cum[i, j]   = 1 iff i is in j's group, 1 <= i%Q <= j%Q   (applied to sp)
    n_out == 1 degenerates to sel_first = I, sel_cum = 0 (matches torch path)."""
    MQ = y_dim * n_out
    i = np.arange(MQ)[:, None]   # input column index
    j = np.arange(MQ)[None, :]   # output column index
    same_group = (i // n_out) == (j // n_out)
    sel_first = (i == (j // n_out) * n_out).astype(np.float32)
    sel_cum = (same_group & (i % n_out >= 1) & (i % n_out <= j % n_out)).astype(np.float32)
    return sel_first, sel_cum


def prepare_params(w1, b1, w2, b2, *, y_dim, n_out, compute_dtype=jnp.float32):
    """One-time parameter prep: lane-pad the hidden width, build selectors.

    Returns a pytree of device arrays; do this ONCE, not per forward call.
    compute_dtype=jnp.bfloat16 halves weight/selector DMA and enables full-rate
    MXU on v6e/v7x (activations stay f32; selectors are 0/1 so exact in bf16).
    """
    D, H = w1.shape
    MQ = y_dim * n_out
    assert w2.shape == (H, MQ)
    H_pad = _round_up(H, 128)

    w1p = jnp.zeros((D, H_pad), compute_dtype).at[:, :H].set(w1.astype(compute_dtype))
    b1p = jnp.zeros((1, H_pad), jnp.float32).at[:, :H].set(jnp.reshape(b1, (1, H)))
    w2p = jnp.zeros((H_pad, MQ), compute_dtype).at[:H, :].set(w2.astype(compute_dtype))
    b2p = jnp.reshape(b2, (1, MQ)).astype(jnp.float32)
    sf, sc = _make_selectors(y_dim, n_out)
    return (w1p, b1p, w2p, b2p,
            jnp.asarray(sf, compute_dtype), jnp.asarray(sc, compute_dtype))


def _choose_batch_tile(B, requested, multiple, min_steps=2):
    """Tile is a multiple of `multiple`, capped so the grid has >= min_steps
    steps when B allows it (keeps both v7x TensorCores busy)."""
    requested = max(multiple, _round_up(int(requested), multiple))
    b_min = _round_up(B, multiple)
    cap = max(multiple, _round_up(-(-b_min // min_steps), multiple))
    return min(requested, cap)


@partial(jax.jit, static_argnames=("y_dim", "n_out", "max_batch_tile"))
def quantile_network_forward(x, prepared, *, y_dim, n_out, max_batch_tile=512):
    """Pallas forward pass of QuantileNetworkMM.forward()."""
    w1p, b1p, w2p, b2p, sel_first, sel_cum = prepared
    B, D = x.shape
    H_pad = w1p.shape[1]
    MQ = y_dim * n_out
    assert w2p.shape == (H_pad, MQ)

    # Pre-cast x once in the wrapper (no per-tile cast inside the kernel).
    if x.dtype != w1p.dtype:
        x = x.astype(w1p.dtype)

    sub = 16 if w1p.dtype == jnp.bfloat16 else 8   # sublane packing multiple
    batch_tile = _choose_batch_tile(B, max_batch_tile, sub)
    B_pad = _round_up(B, batch_tile)
    xp = x if B_pad == B else jnp.pad(x, ((0, B_pad - B), (0, 0)))

    fixed = lambda i: (0, 0)
    out_flat = pl.pallas_call(
        _quantile_mlp_kernel,
        out_shape=jax.ShapeDtypeStruct((B_pad, MQ), jnp.float32),
        grid=(B_pad // batch_tile,),
        in_specs=[
            pl.BlockSpec((batch_tile, D), lambda i: (i, 0)),   # x tile
            pl.BlockSpec((D, H_pad), fixed),                   # W1 (H lane-padded)
            pl.BlockSpec((1, H_pad), fixed),                   # b1
            pl.BlockSpec((H_pad, MQ), fixed),                  # W2 (real MQ cols)
            pl.BlockSpec((1, MQ), fixed),                      # b2
            pl.BlockSpec((MQ, MQ), fixed),                     # group-leader selector
            pl.BlockSpec((MQ, MQ), fixed),                     # cumulative selector
        ],
        out_specs=pl.BlockSpec((batch_tile, MQ), lambda i: (i, 0)),
        compiler_params=pltpu.CompilerParams(
            dimension_semantics=("parallel",)),  # shards batch tiles across TCs
    )(xp, w1p, b1p, w2p, b2p, sel_first, sel_cum)

    if B_pad != B:
        out_flat = out_flat[:B]
    # TODO(synk): torch only reshapes when y_mean is 2-D; the 1-D y_mean case
    # simply skips this reshape (host-side glue, not kernel work).
    return out_flat.reshape(B, y_dim, n_out)


def reference_forward(x, params, *, y_dim, n_out):
    """Pure-JAX reference mirroring the torch forward() (incl. Softplus threshold)."""
    w1, b1, w2, b2 = params
    h = jnp.maximum(x @ w1 + b1, 0.0)
    fout = (h @ w2 + b2).reshape(-1, y_dim, n_out)
    if n_out == 1:
        return fout
    sp = _softplus_torch(fout[..., 1:])
    return jnp.concatenate(
        [fout[..., 0:1], fout[..., 0:1] + jnp.cumsum(sp, axis=-1)], axis=-1)


if __name__ == "__main__":
    # Small deterministic configuration (ragged batch exercises the tile pad).
    B, D, H = 250, 16, 32         # batch, input features, hidden width
    y_dim, n_out = 4, 8           # multivariate targets, quantiles per target
    MQ = y_dim * n_out

    key = jax.random.PRNGKey(0)
    kx, k1, k2, k3, k4 = jax.random.split(key, 5)
    x = jax.random.normal(kx, (B, D), dtype=jnp.float32)

    # Deterministic PyTorch-Linear-style init (uniform +- 1/sqrt(fan_in)).
    w1 = jax.random.uniform(k1, (D, H), jnp.float32, -1.0, 1.0) / np.sqrt(D)
    b1 = jax.random.uniform(k2, (1, H), jnp.float32, -1.0, 1.0) / np.sqrt(D)
    w2 = jax.random.uniform(k3, (H, MQ), jnp.float32, -1.0, 1.0) / np.sqrt(H)
    b2 = jax.random.uniform(k4, (1, MQ), jnp.float32, -1.0, 1.0) / np.sqrt(H)
    params = (w1, b1, w2, b2)

    # One-time prep (use compute_dtype=jnp.bfloat16 in production on v6e/v7x;
    # f32 here to keep the rtol=1e-5 check against the reference tight).
    prepared = prepare_params(w1, b1, w2, b2, y_dim=y_dim, n_out=n_out,
                              compute_dtype=jnp.float32)

    # Tile heuristic picks 128 here -> grid=(2,) so both v7x TCs get a tile.
    out = quantile_network_forward(x, prepared, y_dim=y_dim, n_out=n_out)
    out = jax.block_until_ready(out)

    ref = reference_forward(x, params, y_dim=y_dim, n_out=n_out)
    np.testing.assert_allclose(np.asarray(out), np.asarray(ref),
                               rtol=1e-5, atol=1e-5)
    assert out.shape == (B, y_dim, n_out)

    # TODO(synk): predict()'s host-side tX normalization and y_mean/y_std
    # de-normalization are numpy/CPU glue around forward(); not kernel work.
    print("KERNEL_OK")
</pallas_src>

<mosaic_0001>
module attributes {stable_mosaic.version = 11 : i64} {
  func.func @_quantile_mlp_kernel(%arg0: i32, %arg1: memref<128x16xf32, #tpu.memory_space<vmem>>, %arg2: memref<16x128xf32, #tpu.memory_space<vmem>>, %arg3: memref<1x128xf32, #tpu.memory_space<vmem>>, %arg4: memref<128x32xf32, #tpu.memory_space<vmem>>, %arg5: memref<1x32xf32, #tpu.memory_space<vmem>>, %arg6: memref<32x32xf32, #tpu.memory_space<vmem>>, %arg7: memref<32x32xf32, #tpu.memory_space<vmem>>, %arg8: memref<128x32xf32, #tpu.memory_space<vmem>>) attributes {dimension_semantics = [#tpu.dimension_semantics<parallel>], iteration_bounds = array<i64: 2>, scalar_prefetch = 0 : i64, scratch_operands = 0 : i64, tpu.core_type = #tpu.core_type<tc>, window_params = [{transform_indices = @transform_0, window_bounds = array<i64: 128, 16>}, {pipeline_mode = #tpu.pipeline_mode<synchronous>, transform_indices = @transform_1, window_bounds = array<i64: 16, 128>}, {pipeline_mode = #tpu.pipeline_mode<synchronous>, transform_indices = @transform_2, window_bounds = array<i64: 1, 128>}, {pipeline_mode = #tpu.pipeline_mode<synchronous>, transform_indices = @transform_3, window_bounds = array<i64: 128, 32>}, {pipeline_mode = #tpu.pipeline_mode<synchronous>, transform_indices = @transform_4, window_bounds = array<i64: 1, 32>}, {pipeline_mode = #tpu.pipeline_mode<synchronous>, transform_indices = @transform_5, window_bounds = array<i64: 32, 32>}, {pipeline_mode = #tpu.pipeline_mode<synchronous>, transform_indices = @transform_6, window_bounds = array<i64: 32, 32>}, {transform_indices = @transform_7, window_bounds = array<i64: 128, 32>}]} {
    %c0 = arith.constant 0 : index
    %c0_0 = arith.constant 0 : index
    %0 = vector.load %arg1[%c0, %c0_0] : memref<128x16xf32, #tpu.memory_space<vmem>>, vector<128x16xf32>
    %c0_1 = arith.constant 0 : index
    %c0_2 = arith.constant 0 : index
    %1 = vector.load %arg2[%c0_1, %c0_2] : memref<16x128xf32, #tpu.memory_space<vmem>>, vector<16x128xf32>
    %cst = arith.constant dense<0.000000e+00> : vector<128x128xf32>
    %2 = tpu.matmul %0, %1, %cst {dimension_numbers = #tpu.dot_dimension_numbers<[1], [0], [0], [1], [0, 0, 1, 1], [], []>} : vector<128x16xf32>, vector<16x128xf32>, vector<128x128xf32> -> vector<128x128xf32>
    %c0_3 = arith.constant 0 : index
    %c0_4 = arith.constant 0 : index
    %3 = vector.load %arg3[%c0_3, %c0_4] : memref<1x128xf32, #tpu.memory_space<vmem>>, vector<1x128xf32>
    %4 = vector.broadcast %3 : vector<1x128xf32> to vector<128x128xf32>
    %5 = arith.addf %2, %4 : vector<128x128xf32>
    %cst_5 = arith.constant 0.000000e+00 : f32
    %6 = vector.broadcast %cst_5 : f32 to vector<128x128xf32>
    %7 = arith.maximumf %5, %6 : vector<128x128xf32>
    %c0_6 = arith.constant 0 : index
    %c0_7 = arith.constant 0 : index
    %8 = vector.load %arg4[%c0_6, %c0_7] : memref<128x32xf32, #tpu.memory_space<vmem>>, vector<128x32xf32>
    %cst_8 = arith.constant dense<0.000000e+00> : vector<128x32xf32>
    %9 = tpu.matmul %7, %8, %cst_8 {dimension_numbers = #tpu.dot_dimension_numbers<[1], [0], [0], [1], [0, 0, 1, 1], [], []>} : vector<128x128xf32>, vector<128x32xf32>, vector<128x32xf32> -> vector<128x32xf32>
    %c0_9 = arith.constant 0 : index
    %c0_10 = arith.constant 0 : index
    %10 = vector.load %arg5[%c0_9, %c0_10] : memref<1x32xf32, #tpu.memory_space<vmem>>, vector<1x32xf32>
    %11 = vector.broadcast %10 : vector<1x32xf32> to vector<128x32xf32>
    %12 = arith.addf %9, %11 : vector<128x32xf32>
    %cst_11 = arith.constant 2.000000e+01 : f32
    %13 = vector.broadcast %cst_11 : f32 to vector<128x32xf32>
    %14 = arith.cmpf ogt, %12, %13 : vector<128x32xf32>
    %cst_12 = arith.constant 2.000000e+01 : f32
    %15 = vector.broadcast %cst_12 : f32 to vector<128x32xf32>
    %16 = arith.minimumf %12, %15 : vector<128x32xf32>
    %17 = math.exp %16 : vector<128x32xf32>
    %18 = math.log1p %17 : vector<128x32xf32>
    %19 = arith.select %14, %12, %18 : vector<128x32xi1>, vector<128x32xf32>
    %c0_13 = arith.constant 0 : index
    %c0_14 = arith.constant 0 : index
    %20 = vector.load %arg6[%c0_13, %c0_14] : memref<32x32xf32, #tpu.memory_space<vmem>>, vector<32x32xf32>
    %cst_15 = arith.constant dense<0.000000e+00> : vector<128x32xf32>
    %21 = tpu.matmul %12, %20, %cst_15 {dimension_numbers = #tpu.dot_dimension_numbers<[1], [0], [0], [1], [0, 0, 1, 1], [], []>} : vector<128x32xf32>, vector<32x32xf32>, vector<128x32xf32> -> vector<128x32xf32>
    %c0_16 = arith.constant 0 : index
    %c0_17 = arith.constant 0 : index
    %22 = vector.load %arg7[%c0_16, %c0_17] : memref<32x32xf32, #tpu.memory_space<vmem>>, vector<32x32xf32>
    %cst_18 = arith.constant dense<0.000000e+00> : vector<128x32xf32>
    %23 = tpu.matmul %19, %22, %cst_18 {dimension_numbers = #tpu.dot_dimension_numbers<[1], [0], [0], [1], [0, 0, 1, 1], [], []>} : vector<128x32xf32>, vector<32x32xf32>, vector<128x32xf32> -> vector<128x32xf32>
    %24 = arith.addf %21, %23 : vector<128x32xf32>
    %c0_19 = arith.constant 0 : index
    %c0_20 = arith.constant 0 : index
    %25 = vector.load %arg8[%c0_19, %c0_20] : memref<128x32xf32, #tpu.memory_space<vmem>>, vector<128x32xf32>
    tpu.vector_store %arg8[%c0_19, %c0_20], %24 {strides = array<i32>} : memref<128x32xf32, #tpu.memory_space<vmem>>, vector<128x32xf32>,
    return
  }
  func.func @transform_0(%arg0: i32) -> (i32, i32) {
    %c0_i32 = arith.constant 0 : i32
    %c0_i32_0 = arith.constant 0 : i32
    return %arg0, %c0_i32 : i32, i32
  }
  func.func @transform_1(%arg0: i32) -> (i32, i32) {
    %c0_i32 = arith.constant 0 : i32
    %c0_i32_0 = arith.constant 0 : i32
    %c0_i32_1 = arith.constant 0 : i32
    return %c0_i32, %c0_i32_0 : i32, i32
  }
  func.func @transform_2(%arg0: i32) -> (i32, i32) {
    %c0_i32 = arith.constant 0 : i32
    %c0_i32_0 = arith.constant 0 : i32
    %c0_i32_1 = arith.constant 0 : i32
    return %c0_i32, %c0_i32_0 : i32, i32
  }
  func.func @transform_3(%arg0: i32) -> (i32, i32) {
    %c0_i32 = arith.constant 0 : i32
    %c0_i32_0 = arith.constant 0 : i32
    %c0_i32_1 = arith.constant 0 : i32
    return %c0_i32, %c0_i32_0 : i32, i32
  }
  func.func @transform_4(%arg0: i32) -> (i32, i32) {
    %c0_i32 = arith.constant 0 : i32
    %c0_i32_0 = arith.constant 0 : i32
    %c0_i32_1 = arith.constant 0 : i32
    return %c0_i32, %c0_i32_0 : i32, i32
  }
  func.func @transform_5(%arg0: i32) -> (i32, i32) {
    %c0_i32 = arith.constant 0 : i32
    %c0_i32_0 = arith.constant 0 : i32
    %c0_i32_1 = arith.constant 0 : i32
    return %c0_i32, %c0_i32_0 : i32, i32
  }
  func.func @transform_6(%arg0: i32) -> (i32, i32) {
    %c0_i32 = arith.constant 0 : i32
    %c0_i32_0 = arith.constant 0 : i32
    %c0_i32_1 = arith.constant 0 : i32
    return %c0_i32, %c0_i32_0 : i32, i32
  }
  func.func @transform_7(%arg0: i32) -> (i32, i32) {
    %c0_i32 = arith.constant 0 : i32
    %c0_i32_0 = arith.constant 0 : i32
    return %arg0, %c0_i32 : i32, i32
  }
}

</mosaic_0001>

<llo_original>
// kernel: quantile_network_forward.1
$region0: #{quantile_network_forward.1}
  #allocation0 [shape = 'u32[]', space=smem, size = 0x4, offset = 0x4, fixed_abs, tag = 'smem constant byte address 0x4 - core index']
  #allocation1 [shape = 'u32[144,128]{1,0:T(1,128)}', space=vmem, size = 0x12000, scoped, tag = 'internal scratch']
  %s0 = inlined_call_operand.vmem [shape: f32[256,16], index: 0, kind: input, shape index: {}]
  %s1 = inlined_call_operand.vmem [shape: f32[16,128], index: 1, kind: input, shape index: {}]
  %s2 = inlined_call_operand.vmem [shape: f32[1,128], index: 2, kind: input, shape index: {}]
  %s3 = inlined_call_operand.vmem [shape: f32[128,32], index: 3, kind: input, shape index: {}]
  %s4 = inlined_call_operand.vmem [shape: f32[1,32], index: 4, kind: input, shape index: {}]
  %s5 = inlined_call_operand.vmem [shape: f32[32,32], index: 5, kind: input, shape index: {}]
  %s6 = inlined_call_operand.vmem [shape: f32[32,32], index: 6, kind: input, shape index: {}]
  %s7 = inlined_call_operand.vmem [shape: f32[256,32], index: 7, kind: output, shape index: {}]
  %s8 = sld [smem:[#allocation0]]
  $region61: #{quantile_network_forward.1} parent=0
    _
  %s10 = ssub.s32 1, %s8
  %s11 = scalar_select 0, %s10, %s8
  loop: start=0, step=1, limit=4
  $region2: #{quantile_network_forward.1} parent=0 // loop_pre_header
    _
  $region3: #{quantile_network_forward.1} parent=0 // loop_header
    %s13 = sphi 0, %s17
    %p14 = scmp.ge.s32.totalorder %s13, 4
    %s23 = sphi 0, %s25
    %s26 = sphi 0, %s23
    %s27 = sphi 0, %s26
    %s43 = sphi 0, %s27
    %s47 = sphi 0, %s47
    %s49 = sphi 0, %s47
    %s50 = sphi 0, %s49
    %s64 = sphi 0, %s50
    %s68 = sphi 0, %s68
    %s70 = sphi 0, %s68
    %s71 = sphi 0, %s70
    %s85 = sphi 0, %s71
    %s89 = sphi 0, %s89
    %s91 = sphi 0, %s89
    %s92 = sphi 0, %s91
    %s106 = sphi 0, %s92
    %s110 = sphi 0, %s110
    %s112 = sphi 0, %s110
    %s113 = sphi 0, %s112
    %s127 = sphi 0, %s113
    %s131 = sphi 0, %s131
    %s133 = sphi 0, %s131
    %s134 = sphi 0, %s133
    %s148 = sphi 0, %s134
    %s152 = sphi 0, %s152
    %s154 = sphi 0, %s152
    %s155 = sphi 0, %s154
    %s169 = sphi 0, %s155
    %s175 = sphi 0, %s177
    %s178 = sphi 0, %s175
    %s179 = sphi 0, %s178
    %s195 = sphi 0, %s179
  $region4: #{quantile_network_forward.1} parent=0 // loop_header_branch
    %16 = sbr.rel (%p14) target = $region8
  $region5: #{quantile_network_forward.1} parent=0 // loop_body
    %s18 = ssub.s32 %s13, 1
    %s19 = ssub.s32 %s13, 2
    %s20 = sadd.s32 %s13, 1
    %s21 = ssub.s32 %s13, %s20
    %p22 = scmp.eq.s32.totalorder %s21, 0
    %s24 = sadd.s32 %s23, 1
    %s25 = scalar_select %p22, %s23, %s24
    %p28 = pneg %p22
    %p29 = scmp.eq.s32.totalorder %s13, 1
    %p30 = por %p28, %p29
    %p31 = scmp.ne.s32.totalorder %s23, %s26
    %p32 = scmp.eq.s32.totalorder %s13, 0
    %p33 = por %p31, %p32
    %p34 = scmp.ne.s32.totalorder %s23, %s26
    %p35 = scmp.eq.s32.totalorder %s18, 1
    %p36 = por %p34, %p35
    %p37 = scmp.ne.s32.totalorder %s26, %s27
    %p38 = scmp.eq.s32.totalorder %s18, 0
    %p39 = por %p37, %p38
    %p40 = scmp.ne.s32.totalorder %s26, %s27
    %p41 = scmp.eq.s32.totalorder %s19, 1
    %p42 = por %p40, %p41
    %p44 = scmp.ne.s32.totalorder %s27, %s43
    %p45 = scmp.eq.s32.totalorder %s19, 0
    %p46 = por %p44, %p45
    %s48 = sadd.s32 %s47, 1
    %p51 = scmp.eq.s32.totalorder %s13, 1
    %p52 = scmp.ne.s32.totalorder %s47, %s49
    %p53 = scmp.eq.s32.totalorder %s13, 0
    %p54 = por %p52, %p53
    %p55 = scmp.ne.s32.totalorder %s47, %s49
    %p56 = scmp.eq.s32.totalorder %s18, 1
    %p57 = por %p55, %p56
    %p58 = scmp.ne.s32.totalorder %s49, %s50
    %p59 = scmp.eq.s32.totalorder %s18, 0
    %p60 = por %p58, %p59
    %p61 = scmp.ne.s32.totalorder %s49, %s50
    %p62 = scmp.eq.s32.totalorder %s19, 1
    %p63 = por %p61, %p62
    %p65 = scmp.ne.s32.totalorder %s50, %s64
    %p66 = scmp.eq.s32.totalorder %s19, 0
    %p67 = por %p65, %p66
    %s69 = sadd.s32 %s68, 1
    %p72 = scmp.eq.s32.totalorder %s13, 1
    %p73 = scmp.ne.s32.totalorder %s68, %s70
    %p74 = scmp.eq.s32.totalorder %s13, 0
    %p75 = por %p73, %p74
    %p76 = scmp.ne.s32.totalorder %s68, %s70
    %p77 = scmp.eq.s32.totalorder %s18, 1
    %p78 = por %p76, %p77
    %p79 = scmp.ne.s32.totalorder %s70, %s71
    %p80 = scmp.eq.s32.totalorder %s18, 0
    %p81 = por %p79, %p80
    %p82 = scmp.ne.s32.totalorder %s70, %s71
    %p83 = scmp.eq.s32.totalorder %s19, 1
    %p84 = por %p82, %p83
    %p86 = scmp.ne.s32.totalorder %s71, %s85
    %p87 = scmp.eq.s32.totalorder %s19, 0
    %p88 = por %p86, %p87
    %s90 = sadd.s32 %s89, 1
    %p93 = scmp.eq.s32.totalorder %s13, 1
    %p94 = scmp.ne.s32.totalorder %s89, %s91
    %p95 = scmp.eq.s32.totalorder %s13, 0
    %p96 = por %p94, %p95
    %p97 = scmp.ne.s32.totalorder %s89, %s91
    %p98 = scmp.eq.s32.totalorder %s18, 1
    %p99 = por %p97, %p98
    %p100 = scmp.ne.s32.totalorder %s91, %s92
    %p101 = scmp.eq.s32.totalorder %s18, 0
    %p102 = por %p100, %p101
    %p103 = scmp.ne.s32.totalorder %s91, %s92
    %p104 = scmp.eq.s32.totalorder %s19, 1
    %p105 = por %p103, %p104
    %p107 = scmp.ne.s32.totalorder %s92, %s106
    %p108 = scmp.eq.s32.totalorder %s19, 0
    %p109 = por %p107, %p108
    %s111 = sadd.s32 %s110, 1
    %p114 = scmp.eq.s32.totalorder %s13, 1
    %p115 = scmp.ne.s32.totalorder %s110, %s112
    %p116 = scmp.eq.s32.totalorder %s13, 0
    %p117 = por %p115, %p116
    %p118 = scmp.ne.s32.totalorder %s110, %s112
    %p119 = scmp.eq.s32.totalorder %s18, 1
    %p120 = por %p118, %p119
    %p121 = scmp.ne.s32.totalorder %s112, %s113
    %p122 = scmp.eq.s32.totalorder %s18, 0
    %p123 = por %p121, %p122
    %p124 = scmp.ne.s32.totalorder %s112, %s113
    %p125 = scmp.eq.s32.totalorder %s19, 1
    %p126 = por %p124, %p125
    %p128 = scmp.ne.s32.totalorder %s113, %s127
    %p129 = scmp.eq.s32.totalorder %s19, 0
    %p130 = por %p128, %p129
    %s132 = sadd.s32 %s131, 1
    %p135 = scmp.eq.s32.totalorder %s13, 1
    %p136 = scmp.ne.s32.totalorder %s131, %s133
    %p137 = scmp.eq.s32.totalorder %s13, 0
    %p138 = por %p136, %p137
    %p139 = scmp.ne.s32.totalorder %s131, %s133
    %p140 = scmp.eq.s32.totalorder %s18, 1
    %p141 = por %p139, %p140
    %p142 = scmp.ne.s32.totalorder %s133, %s134
    %p143 = scmp.eq.s32.totalorder %s18, 0
    %p144 = por %p142, %p143
    %p145 = scmp.ne.s32.totalorder %s133, %s134
    %p146 = scmp.eq.s32.totalorder %s19, 1
    %p147 = por %p145, %p146
    %p149 = scmp.ne.s32.totalorder %s134, %s148
    %p150 = scmp.eq.s32.totalorder %s19, 0
    %p151 = por %p149, %p150
    %s153 = sadd.s32 %s152, 1
    %p156 = scmp.eq.s32.totalorder %s13, 1
    %p157 = scmp.ne.s32.totalorder %s152, %s154
    %p158 = scmp.eq.s32.totalorder %s13, 0
    %p159 = por %p157, %p158
    %p160 = scmp.ne.s32.totalorder %s152, %s154
    %p161 = scmp.eq.s32.totalorder %s18, 1
    %p162 = por %p160, %p161
    %p163 = scmp.ne.s32.totalorder %s154, %s155
    %p164 = scmp.eq.s32.totalorder %s18, 0
    %p165 = por %p163, %p164
    %p166 = scmp.ne.s32.totalorder %s154, %s155
    %p167 = scmp.eq.s32.totalorder %s19, 1
    %p168 = por %p166, %p167
    %p170 = scmp.ne.s32.totalorder %s155, %s169
    %p171 = scmp.eq.s32.totalorder %s19, 0
    %p172 = por %p170, %p171
    %s173 = ssub.s32 %s13, %s20
    %p174 = scmp.eq.s32.totalorder %s173, 0
    %s176 = sadd.s32 %s175, 1
    %s177 = scalar_select %p174, %s175, %s176
    %p180 = pneg %p174
    %p181 = scmp.eq.s32.totalorder %s13, 1
    %p182 = por %p180, %p181
    %p183 = scmp.ne.s32.totalorder %s175, %s178
    %p184 = scmp.eq.s32.totalorder %s13, 0
    %p185 = por %p183, %p184
    %p186 = scmp.ne.s32.totalorder %s175, %s178
    %p187 = scmp.eq.s32.totalorder %s18, 1
    %p188 = por %p186, %p187
    %p189 = scmp.ne.s32.totalorder %s178, %s179
    %p190 = scmp.eq.s32.totalorder %s18, 0
    %p191 = por %p189, %p190
    %p192 = scmp.ne.s32.totalorder %s178, %s179
    %p193 = scmp.eq.s32.totalorder %s19, 1
    %p194 = por %p192, %p193
    %p196 = scmp.ne.s32.totalorder %s179, %s195
    %p197 = scmp.eq.s32.totalorder %s19, 0
    %p198 = por %p196, %p197
    %p199 = scmp.le.s32.totalorder 1, %s13
    %p200 = scmp.lt.s32.totalorder %s13, 3
    %p201 = pnand %p199, %p200
    %p202 = pneg %p201
    // Predicated region
    $region9: #{quantile_network_forward.1} parent=5 // pred_check
      _
    $region10: #{quantile_network_forward.1} parent=5 // pred_check_branch
      %204 = sbr.rel (%p201) target = $region12
    $region11: #{quantile_network_forward.1} parent=5 // pred_region
      %s205 = ssub.s32 %s13, 1
      // Predicated region
      $region13: #{quantile_network_forward.1} parent=11 // pred_check
        %p206 = pneg %p60
      $region14: #{quantile_network_forward.1} parent=11 // pred_check_branch
        %208 = sbr.rel (%p206) target = $region16
      $region15: #{quantile_network_forward.1} parent=11 // pred_region
        _
      $region16: #{quantile_network_forward.1} parent=11 // pred_fallthru
        _
      // Predicated region
      $region17: #{quantile_network_forward.1} parent=11 // pred_check
        %p209 = pneg %p81
      $region18: #{quantile_network_forward.1} parent=11 // pred_check_branch
        %211 = sbr.rel (%p209) target = $region20
      $region19: #{quantile_network_forward.1} parent=11 // pred_region
        _
      $region20: #{quantile_network_forward.1} parent=11 // pred_fallthru
        _
      // Predicated region
      $region21: #{quantile_network_forward.1} parent=11 // pred_check
        %p212 = pneg %p102
      $region22: #{quantile_network_forward.1} parent=11 // pred_check_branch
        %214 = sbr.rel (%p212) target = $region24
      $region23: #{quantile_network_forward.1} parent=11 // pred_region
        _
      $region24: #{quantile_network_forward.1} parent=11 // pred_fallthru
        _
      // Predicated region
      $region25: #{quantile_network_forward.1} parent=11 // pred_check
        %p215 = pneg %p123
      $region26: #{quantile_network_forward.1} parent=11 // pred_check_branch
        %217 = sbr.rel (%p215) target = $region28
      $region27: #{quantile_network_forward.1} parent=11 // pred_region
        _
      $region28: #{quantile_network_forward.1} parent=11 // pred_fallthru
        _
      // Predicated region
      $region29: #{quantile_network_forward.1} parent=11 // pred_check
        %p218 = pneg %p144
      $region30: #{quantile_network_forward.1} parent=11 // pred_check_branch
        %220 = sbr.rel (%p218) target = $region32
      $region31: #{quantile_network_forward.1} parent=11 // pred_region
        _
      $region32: #{quantile_network_forward.1} parent=11 // pred_fallthru
        _
      // Predicated region
      $region33: #{quantile_network_forward.1} parent=11 // pred_check
        %p221 = pneg %p165
      $region34: #{quantile_network_forward.1} parent=11 // pred_check_branch
        %223 = sbr.rel (%p221) target = $region36
      $region35: #{quantile_network_forward.1} parent=11 // pred_region
        _
      $region36: #{quantile_network_forward.1} parent=11 // pred_fallthru
        _
    $region12: #{quantile_network_forward.1} parent=5 // pred_fallthru
      _
    %p224 = scmp.lt.s32.totalorder %s13, 2
    // Predicated region
    $region37: #{quantile_network_forward.1} parent=5 // pred_check
      %p225 = pneg %p224
    $region38: #{quantile_network_forward.1} parent=5 // pred_check_branch
      %227 = sbr.rel (%p225) target = $region40
    $region39: #{quantile_network_forward.1} parent=5 // pred_region
      // Predicated region
      $region41: #{quantile_network_forward.1} parent=39 // pred_check
        %p228 = pneg %p33
      $region42: #{quantile_network_forward.1} parent=39 // pred_check_branch
        %230 = sbr.rel (%p228) target = $region44
      $region43: #{quantile_network_forward.1} parent=39 // pred_region
        %s231 = smul.u32 16, %s13
        %p232 = scmp.lt.s32.totalorder %s231, 31
        %s233 = scalar_select %p232, %s231, 31
        %s234 = smul.addr %s233, 8
        %s235 = scalar_lea.vmem %s0, %s234
        %s236 = smul.u32 16, %s13
      $region44: #{quantile_network_forward.1} parent=39 // pred_fallthru
        _
    $region40: #{quantile_network_forward.1} parent=5 // pred_fallthru
      _
    %p237 = scmp.le.s32.totalorder 1, %s13
    %p238 = scmp.lt.s32.totalorder %s13, 3
    %p239 = pnand %p237, %p238
    %p240 = pneg %p239
    // Predicated region
    $region45: #{quantile_network_forward.1} parent=5 // pred_check
      _
    $region46: #{quantile_network_forward.1} parent=5 // pred_check_branch
      %242 = sbr.rel (%p239) target = $region48
    $region47: #{quantile_network_forward.1} parent=5 // pred_region
      %s243 = ssub.s32 %s13, 1
      %s244 = smul.u32 16, %s18
      %p245 = scmp.lt.s32.totalorder %s244, 31
      %s246 = scalar_select %p245, %s244, 31
      %s247 = smul.addr %s246, 8
      %s248 = scalar_lea.vmem %s0, %s247
      %p249 = pneg %p39
      %p250 = pneg %p36
      %p251 = pneg %p60
      %p252 = pneg %p57
      %p253 = pneg %p81
      %p254 = pneg %p78
      %p255 = pneg %p102
      %p256 = pneg %p99
      %p257 = pneg %p123
      %p258 = pneg %p120
      %p259 = pneg %p144
      %p260 = pneg %p141
      %p261 = pneg %p165
      %p262 = pneg %p162
      %p263 = pneg %p191
      %p264 = pneg %p188
      %s265 = smul.u32 16, %s18
      %p266 = scmp.lt.s32.totalorder %s265, 31
      %s267 = scalar_select %p266, %s265, 31
      %s268 = smul.addr %s267, 8
      %s269 = scalar_lea.vmem %s7, %s268
      %s270 = smul.u32 16, %s18
      %p271 = scmp.lt.s32.totalorder %s270, 31
      %s272 = scalar_select %p271, %s270, 31
      %s273 = smul.addr %s272, 8
      %s274 = scalar_lea.vmem %s0, %s273
      %s275 = smul.u32 16, %s18
      %s276 = smul.u32 16, %s18
      %p277 = scmp.lt.s32.totalorder %s276, 31
      %s278 = scalar_select %p277, %s276, 31
      %s279 = smul.addr %s278, 8
      %s280 = scalar_lea.vmem %s7, %s279
      %s281 = smul.u32 16, %s18
      %v282 = vld [vmem:[%s274] sm:$0xff]
      %v283 = vld [vmem:[%s274 + $0x8] sm:$0xff]
      %v284 = vld [vmem:[%s274 + $0x10] sm:$0xff]
      %v285 = vld [vmem:[%s274 + $0x18] sm:$0xff]
      %v286 = vld [vmem:[%s274 + $0x20] sm:$0xff]
      %v287 = vld [vmem:[%s274 + $0x28] sm:$0xff]
      %v288 = vld [vmem:[%s274 + $0x30] sm:$0xff]
      %v289 = vld [vmem:[%s274 + $0x38] sm:$0xff]
      %v290 = vld [vmem:[%s274 + $0x40] sm:$0xff]
      %v291 = vld [vmem:[%s274 + $0x48] sm:$0xff]
      %v292 = vld [vmem:[%s274 + $0x50] sm:$0xff]
      %v293 = vld [vmem:[%s274 + $0x58] sm:$0xff]
      %v294 = vld [vmem:[%s274 + $0x60] sm:$0xff]
      %v295 = vld [vmem:[%s274 + $0x68] sm:$0xff]
      %v296 = vld [vmem:[%s274 + $0x70] sm:$0xff]
      %v297 = vld [vmem:[%s274 + $0x78] sm:$0xff]
      %v298 = vld [vmem:[%s1] sm:$0xff]
      %v299 = vld [vmem:[%s1 + $0x8] sm:$0xff]
      %v300 = vld [vmem:[%s2] sm:$0x1]
      %v302 = vlaneseq
      %v303 = vshrl.u32 %v302, 7
      %v304 = vsub.s32 0, %v303
      %v305 = vrot.slane %v300, %v304
      %vm307 = vcmask 130048
      %v309 = vsel %vm307, %v282, 0
      %v312 = vsel %vm307, %v283, 0
      %v315 = vsel %vm307, %v284, 0
      %v318 = vsel %vm307, %v285, 0
      %v321 = vsel %vm307, %v286, 0
      %v324 = vsel %vm307, %v287, 0
      %v327 = vsel %vm307, %v288, 0
      %v330 = vsel %vm307, %v289, 0
      %v333 = vsel %vm307, %v290, 0
      %v336 = vsel %vm307, %v291, 0
      %v339 = vsel %vm307, %v292, 0
      %v342 = vsel %vm307, %v293, 0
      %v345 = vsel %vm307, %v294, 0
      %v348 = vsel %vm307, %v295, 0
      %v351 = vsel %vm307, %v296, 0
      %v354 = vsel %vm307, %v297, 0
      %356 = vmatprep.subr.mxu0 0.0
      %357 = vmatpush1.msra.mxu0 %v298
      %358 = vmatprep.subr.mxu0 0.0
      %359 = vmatpush1.msra.mxu0 %v299
      %360 = vmatprep.subr.mxu0 0.0
      %361 = vmatpush1.msra.mxu0 0.0
      %362 = vmatprep.subr.mxu0 0.0
      %363 = vmatpush1.msra.mxu0 0.0
      %364 = vmatprep.subr.mxu0 0.0
      %365 = vmatpush1.msra.mxu0 0.0
      %366 = vmatprep.subr.mxu0 0.0
      %367 = vmatpush1.msra.mxu0 0.0
      %368 = vmatprep.subr.mxu0 0.0
      %369 = vmatpush1.msra.mxu0 0.0
      %370 = vmatprep.subr.mxu0 0.0
      %371 = vmatpush1.msra.mxu0 0.0
      %372 = vmatprep.subr.mxu0 0.0
      %373 = vmatpush1.msra.mxu0 0.0
      %374 = vmatprep.subr.mxu0 0.0
      %375 = vmatpush1.msra.mxu0 0.0
      %376 = vmatprep.subr.mxu0 0.0
      %377 = vmatpush1.msra.mxu0 0.0
      %378 = vmatprep.subr.mxu0 0.0
      %379 = vmatpush1.msra.mxu0 0.0
      %380 = vmatprep.subr.mxu0 0.0
      %381 = vmatpush1.msra.mxu0 0.0
      %382 = vmatprep.subr.mxu0 0.0
      %383 = vmatpush1.msra.mxu0 0.0
      %384 = vmatprep.subr.mxu0 0.0
      %385 = vmatpush1.msra.mxu0 0.0
      %386 = vmatprep.subr.mxu0 0.0
      %387 = vmatpush1.msra.mxu0 0.0
      %388 = vmatprep.subr.mxu0 0.0
      %389 = vmatpush1.msra.mxu0 0.0
      %390 = vmatprep.subr.mxu0 0.0
      %391 = vmatpush1.msra.mxu0 0.0
      %392 = vmatprep.subr.mxu0 0.0
      %393 = vmatpush1.msra.mxu0 0.0
      %394 = vmatprep.subr.mxu0 0.0
      %395 = vmatpush1.msra.mxu0 0.0
      %396 = vmatprep.subr.mxu0 0.0
      %397 = vmatpush1.msra.mxu0 0.0
      %398 = vmatprep.subr.mxu0 0.0
      %399 = vmatpush1.msra.mxu0 0.0
      %400 = vmatprep.subr.mxu0 0.0
      %401 = vmatpush1.msra.mxu0 0.0
      %402 = vmatprep.subr.mxu0 0.0
      %403 = vmatpush1.msra.mxu0 0.0
      %404 = vmatprep.subr.mxu0 0.0
      %405 = vmatpush1.msra.mxu0 0.0
      %406 = vmatprep.subr.mxu0 0.0
      %407 = vmatpush1.msra.mxu0 0.0
      %408 = vmatprep.subr.mxu0 0.0
      %409 = vmatpush1.msra.mxu0 0.0
      %410 = vmatprep.subr.mxu0 0.0
      %411 = vmatpush1.msra.mxu0 0.0
      %412 = vmatprep.subr.mxu0 0.0
      %413 = vmatpush1.msra.mxu0 0.0
      %414 = vmatprep.subr.mxu0 0.0
      %415 = vmatpush1.msra.mxu0 0.0
      %416 = vmatprep.subr.mxu0 0.0
      %417 = vmatpush1.msra.mxu0 0.0
      %418 = vmatprep.subr.mxu0 0.0
      %419 = vmatpush1.msra.mxu0 0.0
      %420 = vmatprep.mubr.f32.mxu0 0.0
      %421 = vmatmul.mubr.f32.gmra.mrb[0].mxu0 %v309
      %v422 = vpop.f32.mrb[0].mxu0
      %v423 = vadd.f32 %v305, %v422
      %v424 = vpop.f32.mrb[0].mxu0
      %425 = vmatprep.mubr.f32.mxu0 0.0
      %426 = vmatmul.mubr.f32.gmra.mrb[0].mxu0 %v312
      %v427 = vpop.f32.mrb[0].mxu0
      %v428 = vadd.f32 %v305, %v427
      %v429 = vpop.f32.mrb[0].mxu0
      %430 = vmatprep.mubr.f32.mxu0 0.0
      %431 = vmatmul.mubr.f32.gmra.mrb[0].mxu0 %v315
      %v432 = vpop.f32.mrb[0].mxu0
      %v433 = vadd.f32 %v305, %v432
      %v434 = vpop.f32.mrb[0].mxu0
      %435 = vmatprep.mubr.f32.mxu0 0.0
      %436 = vmatmul.mubr.f32.gmra.mrb[0].mxu0 %v318
      %v437 = vpop.f32.mrb[0].mxu0
      %v438 = vadd.f32 %v305, %v437
      %v439 = vpop.f32.mrb[0].mxu0
      %440 = vmatprep.mubr.f32.mxu0 0.0
      %441 = vmatmul.mubr.f32.gmra.mrb[0].mxu0 %v321
      %v442 = vpop.f32.mrb[0].mxu0
      %v443 = vadd.f32 %v305, %v442
      %v444 = vpop.f32.mrb[0].mxu0
      %445 = vmatprep.mubr.f32.mxu0 0.0
      %446 = vmatmul.mubr.f32.gmra.mrb[0].mxu0 %v324
      %v447 = vpop.f32.mrb[0].mxu0
      %v448 = vadd.f32 %v305, %v447
      %v449 = vpop.f32.mrb[0].mxu0
      %450 = vmatprep.mubr.f32.mxu0 0.0
      %451 = vmatmul.mubr.f32.gmra.mrb[0].mxu0 %v327
      %v452 = vpop.f32.mrb[0].mxu0
      %v453 = vadd.f32 %v305, %v452
      %v454 = vpop.f32.mrb[0].mxu0
      %455 = vmatprep.mubr.f32.mxu0 0.0
      %456 = vmatmul.mubr.f32.gmra.mrb[0].mxu0 %v330
      %v457 = vpop.f32.mrb[0].mxu0
      %v458 = vadd.f32 %v305, %v457
      %v459 = vpop.f32.mrb[0].mxu0
      %460 = vmatprep.mubr.f32.mxu0 0.0
      %461 = vmatmul.mubr.f32.gmra.mrb[0].mxu0 %v333
      %v462 = vpop.f32.mrb[0].mxu0
      %v463 = vadd.f32 %v305, %v462
      %v464 = vpop.f32.mrb[0].mxu0
      %465 = vmatprep.mubr.f32.mxu0 0.0
      %466 = vmatmul.mubr.f32.gmra.mrb[0].mxu0 %v336
      %v467 = vpop.f32.mrb[0].mxu0
      %v468 = vadd.f32 %v305, %v467
      %v469 = vpop.f32.mrb[0].mxu0
      %470 = vmatprep.mubr.f32.mxu0 0.0
      %471 = vmatmul.mubr.f32.gmra.mrb[0].mxu0 %v339
      %v472 = vpop.f32.mrb[0].mxu0
      %v473 = vadd.f32 %v305, %v472
      %v474 = vpop.f32.mrb[0].mxu0
      %475 = vmatprep.mubr.f32.mxu0 0.0
      %476 = vmatmul.mubr.f32.gmra.mrb[0].mxu0 %v342
      %v477 = vpop.f32.mrb[0].mxu0
      %v478 = vadd.f32 %v305, %v477
      %v479 = vpop.f32.mrb[0].mxu0
      %480 = vmatprep.mubr.f32.mxu0 0.0
      %481 = vmatmul.mubr.f32.gmra.mrb[0].mxu0 %v345
      %v482 = vpop.f32.mrb[0].mxu0
      %v483 = vadd.f32 %v305, %v482
      %v484 = vpop.f32.mrb[0].mxu0
      %485 = vmatprep.mubr.f32.mxu0 0.0
      %486 = vmatmul.mubr.f32.gmra.mrb[0].mxu0 %v348
      %v487 = vpop.f32.mrb[0].mxu0
      %v488 = vadd.f32 %v305, %v487
      %v489 = vpop.f32.mrb[0].mxu0
      %490 = vmatprep.mubr.f32.mxu0 0.0
      %491 = vmatmul.mubr.f32.gmra.mrb[0].mxu0 %v351
      %v492 = vpop.f32.mrb[0].mxu0
      %v493 = vadd.f32 %v305, %v492
      %v494 = vpop.f32.mrb[0].mxu0
      %495 = vmatprep.mubr.f32.mxu0 0.0
      %496 = vmatmul.mubr.f32.gmra.mrb[0].mxu0 %v354
      %v497 = vpop.f32.mrb[0].mxu0
      %v498 = vadd.f32 %v305, %v497
      %v499 = vpop.f32.mrb[0].mxu0
      %500 = vdwg.mxu0
      %v501 = vmax.f32 %v423, 0.0
      %v502 = vmax.f32 %v428, 0.0
      %v503 = vmax.f32 %v433, 0.0
      %v504 = vmax.f32 %v438, 0.0
      %v505 = vmax.f32 %v443, 0.0
      %v506 = vmax.f32 %v448, 0.0
      %v507 = vmax.f32 %v453, 0.0
      %v508 = vmax.f32 %v458, 0.0
      %v509 = vmax.f32 %v463, 0.0
      %v510 = vmax.f32 %v468, 0.0
      %v511 = vmax.f32 %v473, 0.0
      %v512 = vmax.f32 %v478, 0.0
      %v513 = vmax.f32 %v483, 0.0
      %v514 = vmax.f32 %v488, 0.0
      %v515 = vmax.f32 %v493, 0.0
      %v516 = vmax.f32 %v498, 0.0
      %v517 = vld [vmem:[%s3] sm:$0xff]
      %v518 = vld [vmem:[%s3 + $0x8] sm:$0xff]
      %v519 = vld [vmem:[%s3 + $0x10] sm:$0xff]
      %v520 = vld [vmem:[%s3 + $0x18] sm:$0xff]
      %v521 = vld [vmem:[%s3 + $0x20] sm:$0xff]
      %v522 = vld [vmem:[%s3 + $0x28] sm:$0xff]
      %v523 = vld [vmem:[%s3 + $0x30] sm:$0xff]
      %v524 = vld [vmem:[%s3 + $0x38] sm:$0xff]
      %v525 = vld [vmem:[%s3 + $0x40] sm:$0xff]
      %v526 = vld [vmem:[%s3 + $0x48] sm:$0xff]
      %v527 = vld [vmem:[%s3 + $0x50] sm:$0xff]
      %v528 = vld [vmem:[%s3 + $0x58] sm:$0xff]
      %v529 = vld [vmem:[%s3 + $0x60] sm:$0xff]
      %v530 = vld [vmem:[%s3 + $0x68] sm:$0xff]
      %v531 = vld [vmem:[%s3 + $0x70] sm:$0xff]
      %v532 = vld [vmem:[%s3 + $0x78] sm:$0xff]
      %v533 = vld [vmem:[%s4] sm:$0x1]
      %v535 = vlaneseq
      %v536 = vshrl.u32 %v535, 7
      %v537 = vsub.s32 0, %v536
      %v538 = vrot.slane %v533, %v537
      %540 = vmatprep.subr.mxu0 0.0
      %541 = vmatpush1.msra.mxu0 %v517
      %542 = vmatprep.subr.mxu0 0.0
      %543 = vmatpush1.msra.mxu0 %v518
      %544 = vmatprep.subr.mxu0 0.0
      %545 = vmatpush1.msra.mxu0 %v519
      %546 = vmatprep.subr.mxu0 0.0
      %547 = vmatpush1.msra.mxu0 %v520
      %548 = vmatprep.subr.mxu0 0.0
      %549 = vmatpush1.msra.mxu0 %v521
      %550 = vmatprep.subr.mxu0 0.0
      %551 = vmatpush1.msra.mxu0 %v522
      %552 = vmatprep.subr.mxu0 0.0
      %553 = vmatpush1.msra.mxu0 %v523
      %554 = vmatprep.subr.mxu0 0.0
      %555 = vmatpush1.msra.mxu0 %v524
      %556 = vmatprep.subr.mxu0 0.0
      %557 = vmatpush1.msra.mxu0 %v525
      %558 = vmatprep.subr.mxu0 0.0
      %559 = vmatpush1.msra.mxu0 %v526
      %560 = vmatprep.subr.mxu0 0.0
      %561 = vmatpush1.msra.mxu0 %v527
      %562 = vmatprep.subr.mxu0 0.0
      %563 = vmatpush1.msra.mxu0 %v528
      %564 = vmatprep.subr.mxu0 0.0
      %565 = vmatpush1.msra.mxu0 %v529
      %566 = vmatprep.subr.mxu0 0.0
      %567 = vmatpush1.msra.mxu0 %v530
      %568 = vmatprep.subr.mxu0 0.0
      %569 = vmatpush1.msra.mxu0 %v531
      %570 = vmatprep.subr.mxu0 0.0
      %571 = vmatpush1.msra.mxu0 %v532
      %572 = vmatprep.subr.mxu0 0.0
      %573 = vmatpush1.msra.mxu0 0.0
      %574 = vmatprep.subr.mxu0 0.0
      %575 = vmatpush1.msra.mxu0 0.0
      %576 = vmatprep.subr.mxu0 0.0
      %577 = vmatpush1.msra.mxu0 0.0
      %578 = vmatprep.subr.mxu0 0.0
      %579 = vmatpush1.msra.mxu0 0.0
      %580 = vmatprep.subr.mxu0 0.0
      %581 = vmatpush1.msra.mxu0 0.0
      %582 = vmatprep.subr.mxu0 0.0
      %583 = vmatpush1.msra.mxu0 0.0
      %584 = vmatprep.subr.mxu0 0.0
      %585 = vmatpush1.msra.mxu0 0.0
      %586 = vmatprep.subr.mxu0 0.0
      %587 = vmatpush1.msra.mxu0 0.0
      %588 = vmatprep.subr.mxu0 0.0
      %589 = vmatpush1.msra.mxu0 0.0
      %590 = vmatprep.subr.mxu0 0.0
      %591 = vmatpush1.msra.mxu0 0.0
      %592 = vmatprep.subr.mxu0 0.0
      %593 = vmatpush1.msra.mxu0 0.0
      %594 = vmatprep.subr.mxu0 0.0
      %595 = vmatpush1.msra.mxu0 0.0
      %596 = vmatprep.subr.mxu0 0.0
      %597 = vmatpush1.msra.mxu0 0.0
      %598 = vmatprep.subr.mxu0 0.0
      %599 = vmatpush1.msra.mxu0 0.0
      %600 = vmatprep.subr.mxu0 0.0
      %601 = vmatpush1.msra.mxu0 0.0
      %602 = vmatprep.subr.mxu0 0.0
      %603 = vmatpush1.msra.mxu0 0.0
      %604 = vmatprep.mubr.f32.mxu0 0.0
      %605 = vmatmul.mubr.f32.gmra.mrb[0].mxu0 %v501
      %v606 = vpop.f32.mrb[0].mxu0
      %v607 = vadd.f32 %v538, %v606
      %v608 = vpop.f32.mrb[0].mxu0
      %609 = vmatprep.mubr.f32.mxu0 0.0
      %610 = vmatmul.mubr.f32.gmra.mrb[0].mxu0 %v502
      %v611 = vpop.f32.mrb[0].mxu0
      %v612 = vadd.f32 %v538, %v611
      %v613 = vpop.f32.mrb[0].mxu0
      %614 = vmatprep.mubr.f32.mxu0 0.0
      %615 = vmatmul.mubr.f32.gmra.mrb[0].mxu0 %v503
      %v616 = vpop.f32.mrb[0].mxu0
      %v617 = vadd.f32 %v538, %v616
      %v618 = vpop.f32.mrb[0].mxu0
      %619 = vmatprep.mubr.f32.mxu0 0.0
      %620 = vmatmul.mubr.f32.gmra.mrb[0].mxu0 %v504
      %v621 = vpop.f32.mrb[0].mxu0
      %v622 = vadd.f32 %v538, %v621
      %v623 = vpop.f32.mrb[0].mxu0
      %624 = vmatprep.mubr.f32.mxu0 0.0
      %625 = vmatmul.mubr.f32.gmra.mrb[0].mxu0 %v505
      %v626 = vpop.f32.mrb[0].mxu0
      %v627 = vadd.f32 %v538, %v626
      %v628 = vpop.f32.mrb[0].mxu0
      %629 = vmatprep.mubr.f32.mxu0 0.0
      %630 = vmatmul.mubr.f32.gmra.mrb[0].mxu0 %v506
      %v631 = vpop.f32.mrb[0].mxu0
      %v632 = vadd.f32 %v538, %v631
      %v633 = vpop.f32.mrb[0].mxu0
      %634 = vmatprep.mubr.f32.mxu0 0.0
      %635 = vmatmul.mubr.f32.gmra.mrb[0].mxu0 %v507
      %v636 = vpop.f32.mrb[0].mxu0
      %v637 = vadd.f32 %v538, %v636
      %v638 = vpop.f32.mrb[0].mxu0
      %639 = vmatprep.mubr.f32.mxu0 0.0
      %640 = vmatmul.mubr.f32.gmra.mrb[0].mxu0 %v508
      %v641 = vpop.f32.mrb[0].mxu0
      %v642 = vadd.f32 %v538, %v641
      %v643 = vpop.f32.mrb[0].mxu0
      %644 = vmatprep.mubr.f32.mxu0 0.0
      %645 = vmatmul.mubr.f32.gmra.mrb[0].mxu0 %v509
      %v646 = vpop.f32.mrb[0].mxu0
      %v647 = vadd.f32 %v538, %v646
      %v648 = vpop.f32.mrb[0].mxu0
      %649 = vmatprep.mubr.f32.mxu0 0.0
      %650 = vmatmul.mubr.f32.gmra.mrb[0].mxu0 %v510
      %v651 = vpop.f32.mrb[0].mxu0
      %v652 = vadd.f32 %v538, %v651
      %v653 = vpop.f32.mrb[0].mxu0
      %654 = vmatprep.mubr.f32.mxu0 0.0
      %655 = vmatmul.mubr.f32.gmra.mrb[0].mxu0 %v511
      %v656 = vpop.f32.mrb[0].mxu0
      %v657 = vadd.f32 %v538, %v656
      %v658 = vpop.f32.mrb[0].mxu0
      %659 = vmatprep.mubr.f32.mxu0 0.0
      %660 = vmatmul.mubr.f32.gmra.mrb[0].mxu0 %v512
      %v661 = vpop.f32.mrb[0].mxu0
      %v662 = vadd.f32 %v538, %v661
      %v663 = vpop.f32.mrb[0].mxu0
      %664 = vmatprep.mubr.f32.mxu0 0.0
      %665 = vmatmul.mubr.f32.gmra.mrb[0].mxu0 %v513
      %v666 = vpop.f32.mrb[0].mxu0
      %v667 = vadd.f32 %v538, %v666
      %v668 = vpop.f32.mrb[0].mxu0
      %669 = vmatprep.mubr.f32.mxu0 0.0
      %670 = vmatmul.mubr.f32.gmra.mrb[0].mxu0 %v514
      %v671 = vpop.f32.mrb[0].mxu0
      %v672 = vadd.f32 %v538, %v671
      %v673 = vpop.f32.mrb[0].mxu0
      %674 = vmatprep.mubr.f32.mxu0 0.0
      %675 = vmatmul.mubr.f32.gmra.mrb[0].mxu0 %v515
      %v676 = vpop.f32.mrb[0].mxu0
      %v677 = vadd.f32 %v538, %v676
      %v678 = vpop.f32.mrb[0].mxu0
      %679 = vmatprep.mubr.f32.mxu0 0.0
      %680 = vmatmul.mubr.f32.gmra.mrb[0].mxu0 %v516
      %v681 = vpop.f32.mrb[0].mxu0
      %v682 = vadd.f32 %v538, %v681
      %v683 = vpop.f32.mrb[0].mxu0
      %684 = vdwg.mxu0
      %vm685 = vcmp.gt.f32.partialorder %v607, 20.0
      %vm686 = vcmp.gt.f32.partialorder %v612, 20.0
      %vm687 = vcmp.gt.f32.partialorder %v617, 20.0
      %vm688 = vcmp.gt.f32.partialorder %v622, 20.0
      %vm689 = vcmp.gt.f32.partialorder %v627, 20.0
      %vm690 = vcmp.gt.f32.partialorder %v632, 20.0
      %vm691 = vcmp.gt.f32.partialorder %v637, 20.0
      %vm692 = vcmp.gt.f32.partialorder %v642, 20.0
      %vm693 = vcmp.gt.f32.partialorder %v647, 20.0
      %vm694 = vcmp.gt.f32.partialorder %v652, 20.0
      %vm695 = vcmp.gt.f32.partialorder %v657, 20.0
      %vm696 = vcmp.gt.f32.partialorder %v662, 20.0
      %vm697 = vcmp.gt.f32.partialorder %v667, 20.0
      %vm698 = vcmp.gt.f32.partialorder %v672, 20.0
      %vm699 = vcmp.gt.f32.partialorder %v677, 20.0
      %vm700 = vcmp.gt.f32.partialorder %v682, 20.0
      %v701 = vmin.f32 %v607, 20.0
      %v702 = vmin.f32 %v612, 20.0
      %v703 = vmin.f32 %v617, 20.0
      %v704 = vmin.f32 %v622, 20.0
      %v705 = vmin.f32 %v627, 20.0
      %v706 = vmin.f32 %v632, 20.0
      %v707 = vmin.f32 %v637, 20.0
      %v708 = vmin.f32 %v642, 20.0
      %v709 = vmin.f32 %v647, 20.0
      %v710 = vmin.f32 %v652, 20.0
      %v711 = vmin.f32 %v657, 20.0
      %v712 = vmin.f32 %v662, 20.0
      %v713 = vmin.f32 %v667, 20.0
      %v714 = vmin.f32 %v672, 20.0
      %v715 = vmin.f32 %v677, 20.0
      %v716 = vmin.f32 %v682, 20.0
      %v717 = vmul.f32 %v701, 1.442695
      %v718 = vpow.pop %v717
      %v719 = vmul.f32 %v702, 1.442695
      %v720 = vpow.pop %v719
      %v721 = vmul.f32 %v703, 1.442695
      %v722 = vpow.pop %v721
      %v723 = vmul.f32 %v704, 1.442695
      %v724 = vpow.pop %v723
      %v725 = vmul.f32 %v705, 1.442695
      %v726 = vpow.pop %v725
      %v727 = vmul.f32 %v706, 1.442695
      %v728 = vpow.pop %v727
      %v729 = vmul.f32 %v707, 1.442695
      %v730 = vpow.pop %v729
      %v731 = vmul.f32 %v708, 1.442695
      %v732 = vpow.pop %v731
      %v733 = vmul.f32 %v709, 1.442695
      %v734 = vpow.pop %v733
      %v735 = vmul.f32 %v710, 1.442695
      %v736 = vpow.pop %v735
      %v737 = vmul.f32 %v711, 1.442695
      %v738 = vpow.pop %v737
      %v739 = vmul.f32 %v712, 1.442695
      %v740 = vpow.pop %v739
      %v741 = vmul.f32 %v713, 1.442695
      %v742 = vpow.pop %v741
      %v743 = vmul.f32 %v714, 1.442695
      %v744 = vpow.pop %v743
      %v745 = vmul.f32 %v715, 1.442695
      %v746 = vpow.pop %v745
      %v747 = vmul.f32 %v716, 1.442695
      %v748 = vpow.pop %v747
      %v749 = vadd.f32 %v718, 1.0
      %v750 = vlog2.pop %v749
      %v751 = vmul.f32 %v750, 0.6931472
      %v752 = vmul.f32 -0.5, %v718
      %v753 = vadd.f32 %v752, 1.0
      %v754 = vmul.f32 %v753, %v718
      %v755 = vand.u32 2147483647, %v718
      %vm756 = vcmp.lt.f32.partialorder %v755, 0.0004427343
      %v757 = vsel %vm756, %v754, %v751
      %v758 = vadd.f32 %v720, 1.0
      %v759 = vlog2.pop %v758
      %v760 = vmul.f32 %v759, 0.6931472
      %v761 = vmul.f32 -0.5, %v720
      %v762 = vadd.f32 %v761, 1.0
      %v763 = vmul.f32 %v762, %v720
      %v764 = vand.u32 2147483647, %v720
      %vm765 = vcmp.lt.f32.partialorder %v764, 0.0004427343
      %v766 = vsel %vm765, %v763, %v760
      %v767 = vadd.f32 %v722, 1.0
      %v768 = vlog2.pop %v767
      %v769 = vmul.f32 %v768, 0.6931472
      %v770 = vmul.f32 -0.5, %v722
      %v771 = vadd.f32 %v770, 1.0
      %v772 = vmul.f32 %v771, %v722
      %v773 = vand.u32 2147483647, %v722
      %vm774 = vcmp.lt.f32.partialorder %v773, 0.0004427343
      %v775 = vsel %vm774, %v772, %v769
      %v776 = vadd.f32 %v724, 1.0
      %v777 = vlog2.pop %v776
      %v778 = vmul.f32 %v777, 0.6931472
      %v779 = vmul.f32 -0.5, %v724
      %v780 = vadd.f32 %v779, 1.0
      %v781 = vmul.f32 %v780, %v724
      %v782 = vand.u32 2147483647, %v724
      %vm783 = vcmp.lt.f32.partialorder %v782, 0.0004427343
      %v784 = vsel %vm783, %v781, %v778
      %v785 = vadd.f32 %v726, 1.0
      %v786 = vlog2.pop %v785
      %v787 = vmul.f32 %v786, 0.6931472
      %v788 = vmul.f32 -0.5, %v726
      %v789 = vadd.f32 %v788, 1.0
      %v790 = vmul.f32 %v789, %v726
      %v791 = vand.u32 2147483647, %v726
      %vm792 = vcmp.lt.f32.partialorder %v791, 0.0004427343
      %v793 = vsel %vm792, %v790, %v787
      %v794 = vadd.f32 %v728, 1.0
      %v795 = vlog2.pop %v794
      %v796 = vmul.f32 %v795, 0.6931472
      %v797 = vmul.f32 -0.5, %v728
      %v798 = vadd.f32 %v797, 1.0
      %v799 = vmul.f32 %v798, %v728
      %v800 = vand.u32 2147483647, %v728
      %vm801 = vcmp.lt.f32.partialorder %v800, 0.0004427343
      %v802 = vsel %vm801, %v799, %v796
      %v803 = vadd.f32 %v730, 1.0
      %v804 = vlog2.pop %v803
      %v805 = vmul.f32 %v804, 0.6931472
      %v806 = vmul.f32 -0.5, %v730
      %v807 = vadd.f32 %v806, 1.0
      %v808 = vmul.f32 %v807, %v730
      %v809 = vand.u32 2147483647, %v730
      %vm810 = vcmp.lt.f32.partialorder %v809, 0.0004427343
      %v811 = vsel %vm810, %v808, %v805
      %v812 = vadd.f32 %v732, 1.0
      %v813 = vlog2.pop %v812
      %v814 = vmul.f32 %v813, 0.6931472
      %v815 = vmul.f32 -0.5, %v732
      %v816 = vadd.f32 %v815, 1.0
      %v817 = vmul.f32 %v816, %v732
      %v818 = vand.u32 2147483647, %v732
      %vm819 = vcmp.lt.f32.partialorder %v818, 0.0004427343
      %v820 = vsel %vm819, %v817, %v814
      %v821 = vadd.f32 %v734, 1.0
      %v822 = vlog2.pop %v821
      %v823 = vmul.f32 %v822, 0.6931472
      %v824 = vmul.f32 -0.5, %v734
      %v825 = vadd.f32 %v824, 1.0
      %v826 = vmul.f32 %v825, %v734
      %v827 = vand.u32 2147483647, %v734
      %vm828 = vcmp.lt.f32.partialorder %v827, 0.0004427343
      %v829 = vsel %vm828, %v826, %v823
      %v830 = vadd.f32 %v736, 1.0
      %v831 = vlog2.pop %v830
      %v832 = vmul.f32 %v831, 0.6931472
      %v833 = vmul.f32 -0.5, %v736
      %v834 = vadd.f32 %v833, 1.0
      %v835 = vmul.f32 %v834, %v736
      %v836 = vand.u32 2147483647, %v736
      %vm837 = vcmp.lt.f32.partialorder %v836, 0.0004427343
      %v838 = vsel %vm837, %v835, %v832
      %v839 = vadd.f32 %v738, 1.0
      %v840 = vlog2.pop %v839
      %v841 = vmul.f32 %v840, 0.6931472
      %v842 = vmul.f32 -0.5, %v738
      %v843 = vadd.f32 %v842, 1.0
      %v844 = vmul.f32 %v843, %v738
      %v845 = vand.u32 2147483647, %v738
      %vm846 = vcmp.lt.f32.partialorder %v845, 0.0004427343
      %v847 = vsel %vm846, %v844, %v841
      %v848 = vadd.f32 %v740, 1.0
      %v849 = vlog2.pop %v848
      %v850 = vmul.f32 %v849, 0.6931472
      %v851 = vmul.f32 -0.5, %v740
      %v852 = vadd.f32 %v851, 1.0
      %v853 = vmul.f32 %v852, %v740
      %v854 = vand.u32 2147483647, %v740
      %vm855 = vcmp.lt.f32.partialorder %v854, 0.0004427343
      %v856 = vsel %vm855, %v853, %v850
      %v857 = vadd.f32 %v742, 1.0
      %v858 = vlog2.pop %v857
      %v859 = vmul.f32 %v858, 0.6931472
      %v860 = vmul.f32 -0.5, %v742
      %v861 = vadd.f32 %v860, 1.0
      %v862 = vmul.f32 %v861, %v742
      %v863 = vand.u32 2147483647, %v742
      %vm864 = vcmp.lt.f32.partialorder %v863, 0.0004427343
      %v865 = vsel %vm864, %v862, %v859
      %v866 = vadd.f32 %v744, 1.0
      %v867 = vlog2.pop %v866
      %v868 = vmul.f32 %v867, 0.6931472
      %v869 = vmul.f32 -0.5, %v744
      %v870 = vadd.f32 %v869, 1.0
      %v871 = vmul.f32 %v870, %v744
      %v872 = vand.u32 2147483647, %v744
      %vm873 = vcmp.lt.f32.partialorder %v872, 0.0004427343
      %v874 = vsel %vm873, %v871, %v868
      %v875 = vadd.f32 %v746, 1.0
      %v876 = vlog2.pop %v875
      %v877 = vmul.f32 %v876, 0.6931472
      %v878 = vmul.f32 -0.5, %v746
      %v879 = vadd.f32 %v878, 1.0
      %v880 = vmul.f32 %v879, %v746
      %v881 = vand.u32 2147483647, %v746
      %vm882 = vcmp.lt.f32.partialorder %v881, 0.0004427343
      %v883 = vsel %vm882, %v880, %v877
      %v884 = vadd.f32 %v748, 1.0
      %v885 = vlog2.pop %v884
      %v886 = vmul.f32 %v885, 0.6931472
      %v887 = vmul.f32 -0.5, %v748
      %v888 = vadd.f32 %v887, 1.0
      %v889 = vmul.f32 %v888, %v748
      %v890 = vand.u32 2147483647, %v748
      %vm891 = vcmp.lt.f32.partialorder %v890, 0.0004427343
      %v892 = vsel %vm891, %v889, %v886
      %v893 = vsel %vm685, %v607, %v757
      %v894 = vsel %vm686, %v612, %v766
      %v895 = vsel %vm687, %v617, %v775
      %v896 = vsel %vm688, %v622, %v784
      %v897 = vsel %vm689, %v627, %v793
      %v898 = vsel %vm690, %v632, %v802
      %v899 = vsel %vm691, %v637, %v811
      %v900 = vsel %vm692, %v642, %v820
      %v901 = vsel %vm693, %v647, %v829
      %v902 = vsel %vm694, %v652, %v838
      %v903 = vsel %vm695, %v657, %v847
      %v904 = vsel %vm696, %v662, %v856
      %v905 = vsel %vm697, %v667, %v865
      %v906 = vsel %vm698, %v672, %v874
      %v907 = vsel %vm699, %v677, %v883
      %v908 = vsel %vm700, %v682, %v892
      %v909 = vld [vmem:[%s5] sm:$0xff]
      %v910 = vld [vmem:[%s5 + $0x8] sm:$0xff]
      %v911 = vld [vmem:[%s5 + $0x10] sm:$0xff]
      %v912 = vld [vmem:[%s5 + $0x18] sm:$0xff]
      %v913 = vld [vmem:[%s6] sm:$0xff]
      %v914 = vld [vmem:[%s6 + $0x8] sm:$0xff]
      %v915 = vld [vmem:[%s6 + $0x10] sm:$0xff]
      %v916 = vld [vmem:[%s6 + $0x18] sm:$0xff]
      %vm917 = vcmask 261120
      %v919 = vsel %vm917, %v893, 0
      %v922 = vsel %vm917, %v894, 0
      %v925 = vsel %vm917, %v895, 0
      %v928 = vsel %vm917, %v896, 0
      %v931 = vsel %vm917, %v897, 0
      %v934 = vsel %vm917, %v898, 0
      %v937 = vsel %vm917, %v899, 0
      %v940 = vsel %vm917, %v900, 0
      %v943 = vsel %vm917, %v901, 0
      %v946 = vsel %vm917, %v902, 0
      %v949 = vsel %vm917, %v903, 0
      %v952 = vsel %vm917, %v904, 0
      %v955 = vsel %vm917, %v905, 0
      %v958 = vsel %vm917, %v906, 0
      %v961 = vsel %vm917, %v907, 0
      %v964 = vsel %vm917, %v908, 0
      %966 = vmatprep.subr.mxu0 0.0
      %967 = vmatpush1.msra.mxu0 %v913
      %968 = vmatprep.subr.mxu0 0.0
      %969 = vmatpush1.msra.mxu0 %v914
      %970 = vmatprep.subr.mxu0 0.0
      %971 = vmatpush1.msra.mxu0 %v915
      %972 = vmatprep.subr.mxu0 0.0
      %973 = vmatpush1.msra.mxu0 %v916
      %974 = vmatprep.subr.mxu0 0.0
      %975 = vmatpush1.msra.mxu0 0.0
      %976 = vmatprep.subr.mxu0 0.0
      %977 = vmatpush1.msra.mxu0 0.0
      %978 = vmatprep.subr.mxu0 0.0
      %979 = vmatpush1.msra.mxu0 0.0
      %980 = vmatprep.subr.mxu0 0.0
      %981 = vmatpush1.msra.mxu0 0.0
      %982 = vmatprep.subr.mxu0 0.0
      %983 = vmatpush1.msra.mxu0 0.0
      %984 = vmatprep.subr.mxu0 0.0
      %985 = vmatpush1.msra.mxu0 0.0
      %986 = vmatprep.subr.mxu0 0.0
      %987 = vmatpush1.msra.mxu0 0.0
      %988 = vmatprep.subr.mxu0 0.0
      %989 = vmatpush1.msra.mxu0 0.0
      %990 = vmatprep.subr.mxu0 0.0
      %991 = vmatpush1.msra.mxu0 0.0
      %992 = vmatprep.subr.mxu0 0.0
      %993 = vmatpush1.msra.mxu0 0.0
      %994 = vmatprep.subr.mxu0 0.0
      %995 = vmatpush1.msra.mxu0 0.0
      %996 = vmatprep.subr.mxu0 0.0
      %997 = vmatpush1.msra.mxu0 0.0
      %998 = vmatprep.subr.mxu0 0.0
      %999 = vmatpush1.msra.mxu0 0.0
      %1000 = vmatprep.subr.mxu0 0.0
      %1001 = vmatpush1.msra.mxu0 0.0
      %1002 = vmatprep.subr.mxu0 0.0
      %1003 = vmatpush1.msra.mxu0 0.0
      %1004 = vmatprep.subr.mxu0 0.0
      %1005 = vmatpush1.msra.mxu0 0.0
      %1006 = vmatprep.subr.mxu0 0.0
      %1007 = vmatpush1.msra.mxu0 0.0
      %1008 = vmatprep.subr.mxu0 0.0
      %1009 = vmatpush1.msra.mxu0 0.0
      %1010 = vmatprep.subr.mxu0 0.0
      %1011 = vmatpush1.msra.mxu0 0.0
      %1012 = vmatprep.subr.mxu0 0.0
      %1013 = vmatpush1.msra.mxu0 0.0
      %1014 = vmatprep.subr.mxu0 0.0
      %1015 = vmatpush1.msra.mxu0 0.0
      %1016 = vmatprep.subr.mxu0 0.0
      %1017 = vmatpush1.msra.mxu0 0.0
      %1018 = vmatprep.subr.mxu0 0.0
      %1019 = vmatpush1.msra.mxu0 0.0
      %1020 = vmatprep.subr.mxu0 0.0
      %1021 = vmatpush1.msra.mxu0 0.0
      %1022 = vmatprep.subr.mxu0 0.0
      %1023 = vmatpush1.msra.mxu0 0.0
      %1024 = vmatprep.subr.mxu0 0.0
      %1025 = vmatpush1.msra.mxu0 0.0
      %1026 = vmatprep.subr.mxu0 0.0
      %1027 = vmatpush1.msra.mxu0 0.0
      %1028 = vmatprep.subr.mxu0 0.0
      %1029 = vmatpush1.msra.mxu0 0.0
      %1030 = vmatprep.mubr.f32.mxu0 0.0
      %1031 = vmatmul.mubr.f32.gmra.mrb[0].mxu0 %v919
      %v1032 = vpop.f32.mrb[0].mxu0
      %v1033 = vadd.f32 0.0, %v1032
      %v1034 = vpop.f32.mrb[0].mxu0
      %1035 = vmatprep.mubr.f32.mxu0 0.0
      %1036 = vmatmul.mubr.f32.gmra.mrb[0].mxu0 %v922
      %v1037 = vpop.f32.mrb[0].mxu0
      %v1038 = vadd.f32 0.0, %v1037
      %v1039 = vpop.f32.mrb[0].mxu0
      %1040 = vmatprep.mubr.f32.mxu0 0.0
      %1041 = vmatmul.mubr.f32.gmra.mrb[0].mxu0 %v925
      %v1042 = vpop.f32.mrb[0].mxu0
      %v1043 = vadd.f32 0.0, %v1042
      %v1044 = vpop.f32.mrb[0].mxu0
      %1045 = vmatprep.mubr.f32.mxu0 0.0
      %1046 = vmatmul.mubr.f32.gmra.mrb[0].mxu0 %v928
      %v1047 = vpop.f32.mrb[0].mxu0
      %v1048 = vadd.f32 0.0, %v1047
      %v1049 = vpop.f32.mrb[0].mxu0
      %1050 = vmatprep.mubr.f32.mxu0 0.0
      %1051 = vmatmul.mubr.f32.gmra.mrb[0].mxu0 %v931
      %v1052 = vpop.f32.mrb[0].mxu0
      %v1053 = vadd.f32 0.0, %v1052
      %v1054 = vpop.f32.mrb[0].mxu0
      %1055 = vmatprep.mubr.f32.mxu0 0.0
      %1056 = vmatmul.mubr.f32.gmra.mrb[0].mxu0 %v934
      %v1057 = vpop.f32.mrb[0].mxu0
      %v1058 = vadd.f32 0.0, %v1057
      %v1059 = vpop.f32.mrb[0].mxu0
      %1060 = vmatprep.mubr.f32.mxu0 0.0
      %1061 = vmatmul.mubr.f32.gmra.mrb[0].mxu0 %v937
      %v1062 = vpop.f32.mrb[0].mxu0
      %v1063 = vadd.f32 0.0, %v1062
      %v1064 = vpop.f32.mrb[0].mxu0
      %1065 = vmatprep.mubr.f32.mxu0 0.0
      %1066 = vmatmul.mubr.f32.gmra.mrb[0].mxu0 %v940
      %v1067 = vpop.f32.mrb[0].mxu0
      %v1068 = vadd.f32 0.0, %v1067
      %v1069 = vpop.f32.mrb[0].mxu0
      %1070 = vmatprep.mubr.f32.mxu0 0.0
      %1071 = vmatmul.mubr.f32.gmra.mrb[0].mxu0 %v943
      %v1072 = vpop.f32.mrb[0].mxu0
      %v1073 = vadd.f32 0.0, %v1072
      %v1074 = vpop.f32.mrb[0].mxu0
      %1075 = vmatprep.mubr.f32.mxu0 0.0
      %1076 = vmatmul.mubr.f32.gmra.mrb[0].mxu0 %v946
      %v1077 = vpop.f32.mrb[0].mxu0
      %v1078 = vadd.f32 0.0, %v1077
      %v1079 = vpop.f32.mrb[0].mxu0
      %1080 = vmatprep.mubr.f32.mxu0 0.0
      %1081 = vmatmul.mubr.f32.gmra.mrb[0].mxu0 %v949
      %v1082 = vpop.f32.mrb[0].mxu0
      %v1083 = vadd.f32 0.0, %v1082
      %v1084 = vpop.f32.mrb[0].mxu0
      %1085 = vmatprep.mubr.f32.mxu0 0.0
      %1086 = vmatmul.mubr.f32.gmra.mrb[0].mxu0 %v952
      %v1087 = vpop.f32.mrb[0].mxu0
      %v1088 = vadd.f32 0.0, %v1087
      %v1089 = vpop.f32.mrb[0].mxu0
      %1090 = vmatprep.mubr.f32.mxu0 0.0
      %1091 = vmatmul.mubr.f32.gmra.mrb[0].mxu0 %v955
      %v1092 = vpop.f32.mrb[0].mxu0
      %v1093 = vadd.f32 0.0, %v1092
      %v1094 = vpop.f32.mrb[0].mxu0
      %1095 = vmatprep.mubr.f32.mxu0 0.0
      %1096 = vmatmul.mubr.f32.gmra.mrb[0].mxu0 %v958
      %v1097 = vpop.f32.mrb[0].mxu0
      %v1098 = vadd.f32 0.0, %v1097
      %v1099 = vpop.f32.mrb[0].mxu0
      %1100 = vmatprep.mubr.f32.mxu0 0.0
      %1101 = vmatmul.mubr.f32.gmra.mrb[0].mxu0 %v961
      %v1102 = vpop.f32.mrb[0].mxu0
      %v1103 = vadd.f32 0.0, %v1102
      %v1104 = vpop.f32.mrb[0].mxu0
      %1105 = vmatprep.mubr.f32.mxu0 0.0
      %1106 = vmatmul.mubr.f32.gmra.mrb[0].mxu0 %v964
      %v1107 = vpop.f32.mrb[0].mxu0
      %v1108 = vadd.f32 0.0, %v1107
      %v1109 = vpop.f32.mrb[0].mxu0
      %1110 = vdwg.mxu0
      %v1112 = vsel %vm917, %v607, 0
      %v1115 = vsel %vm917, %v612, 0
      %v1118 = vsel %vm917, %v617, 0
      %v1121 = vsel %vm917, %v622, 0
      %v1124 = vsel %vm917, %v627, 0
      %v1127 = vsel %vm917, %v632, 0
      %v1130 = vsel %vm917, %v637, 0
      %v1133 = vsel %vm917, %v642, 0
      %v1136 = vsel %vm917, %v647, 0
      %v1139 = vsel %vm917, %v652, 0
      %v1142 = vsel %vm917, %v657, 0
      %v1145 = vsel %vm917, %v662, 0
      %v1148 = vsel %vm917, %v667, 0
      %v1151 = vsel %vm917, %v672, 0
      %v1154 = vsel %vm917, %v677, 0
      %v1157 = vsel %vm917, %v682, 0
      %1159 = vmatprep.subr.mxu0 0.0
      %1160 = vmatpush1.msra.mxu0 %v909
      %1161 = vmatprep.subr.mxu0 0.0
      %1162 = vmatpush1.msra.mxu0 %v910
      %1163 = vmatprep.subr.mxu0 0.0
      %1164 = vmatpush1.msra.mxu0 %v911
      %1165 = vmatprep.subr.mxu0 0.0
      %1166 = vmatpush1.msra.mxu0 %v912
      %1167 = vmatprep.subr.mxu0 0.0
      %1168 = vmatpush1.msra.mxu0 0.0
      %1169 = vmatprep.subr.mxu0 0.0
      %1170 = vmatpush1.msra.mxu0 0.0
      %1171 = vmatprep.subr.mxu0 0.0
      %1172 = vmatpush1.msra.mxu0 0.0
      %1173 = vmatprep.subr.mxu0 0.0
      %1174 = vmatpush1.msra.mxu0 0.0
      %1175 = vmatprep.subr.mxu0 0.0
      %1176 = vmatpush1.msra.mxu0 0.0
      %1177 = vmatprep.subr.mxu0 0.0
      %1178 = vmatpush1.msra.mxu0 0.0
      %1179 = vmatprep.subr.mxu0 0.0
      %1180 = vmatpush1.msra.mxu0 0.0
      %1181 = vmatprep.subr.mxu0 0.0
      %1182 = vmatpush1.msra.mxu0 0.0
      %1183 = vmatprep.subr.mxu0 0.0
      %1184 = vmatpush1.msra.mxu0 0.0
      %1185 = vmatprep.subr.mxu0 0.0
      %1186 = vmatpush1.msra.mxu0 0.0
      %1187 = vmatprep.subr.mxu0 0.0
      %1188 = vmatpush1.msra.mxu0 0.0
      %1189 = vmatprep.subr.mxu0 0.0
      %1190 = vmatpush1.msra.mxu0 0.0
      %1191 = vmatprep.subr.mxu0 0.0
      %1192 = vmatpush1.msra.mxu0 0.0
      %1193 = vmatprep.subr.mxu0 0.0
      %1194 = vmatpush1.msra.mxu0 0.0
      %1195 = vmatprep.subr.mxu0 0.0
      %1196 = vmatpush1.msra.mxu0 0.0
      %1197 = vmatprep.subr.mxu0 0.0
      %1198 = vmatpush1.msra.mxu0 0.0
      %1199 = vmatprep.subr.mxu0 0.0
      %1200 = vmatpush1.msra.mxu0 0.0
      %1201 = vmatprep.subr.mxu0 0.0
      %1202 = vmatpush1.msra.mxu0 0.0
      %1203 = vmatprep.subr.mxu0 0.0
      %1204 = vmatpush1.msra.mxu0 0.0
      %1205 = vmatprep.subr.mxu0 0.0
      %1206 = vmatpush1.msra.mxu0 0.0
      %1207 = vmatprep.subr.mxu0 0.0
      %1208 = vmatpush1.msra.mxu0 0.0
      %1209 = vmatprep.subr.mxu0 0.0
      %1210 = vmatpush1.msra.mxu0 0.0
      %1211 = vmatprep.subr.mxu0 0.0
      %1212 = vmatpush1.msra.mxu0 0.0
      %1213 = vmatprep.subr.mxu0 0.0
      %1214 = vmatpush1.msra.mxu0 0.0
      %1215 = vmatprep.subr.mxu0 0.0
      %1216 = vmatpush1.msra.mxu0 0.0
      %1217 = vmatprep.subr.mxu0 0.0
      %1218 = vmatpush1.msra.mxu0 0.0
      %1219 = vmatprep.subr.mxu0 0.0
      %1220 = vmatpush1.msra.mxu0 0.0
      %1221 = vmatprep.subr.mxu0 0.0
      %1222 = vmatpush1.msra.mxu0 0.0
      %1223 = vmatprep.mubr.f32.mxu0 0.0
      %1224 = vmatmul.mubr.f32.gmra.mrb[0].mxu0 %v1112
      %v1225 = vpop.f32.mrb[0].mxu0
      %v1226 = vadd.f32 %v1033, %v1225
      %v1227 = vpop.f32.mrb[0].mxu0
      %1228 = vmatprep.mubr.f32.mxu0 0.0
      %1229 = vmatmul.mubr.f32.gmra.mrb[0].mxu0 %v1115
      %v1230 = vpop.f32.mrb[0].mxu0
      %v1231 = vadd.f32 %v1038, %v1230
      %v1232 = vpop.f32.mrb[0].mxu0
      %1233 = vmatprep.mubr.f32.mxu0 0.0
      %1234 = vmatmul.mubr.f32.gmra.mrb[0].mxu0 %v1118
      %v1235 = vpop.f32.mrb[0].mxu0
      %v1236 = vadd.f32 %v1043, %v1235
      %v1237 = vpop.f32.mrb[0].mxu0
      %1238 = vmatprep.mubr.f32.mxu0 0.0
      %1239 = vmatmul.mubr.f32.gmra.mrb[0].mxu0 %v1121
      %v1240 = vpop.f32.mrb[0].mxu0
      %v1241 = vadd.f32 %v1048, %v1240
      %v1242 = vpop.f32.mrb[0].mxu0
      %1243 = vmatprep.mubr.f32.mxu0 0.0
      %1244 = vmatmul.mubr.f32.gmra.mrb[0].mxu0 %v1124
      %v1245 = vpop.f32.mrb[0].mxu0
      %v1246 = vadd.f32 %v1053, %v1245
      %v1247 = vpop.f32.mrb[0].mxu0
      %1248 = vmatprep.mubr.f32.mxu0 0.0
      %1249 = vmatmul.mubr.f32.gmra.mrb[0].mxu0 %v1127
      %v1250 = vpop.f32.mrb[0].mxu0
      %v1251 = vadd.f32 %v1058, %v1250
      %v1252 = vpop.f32.mrb[0].mxu0
      %1253 = vmatprep.mubr.f32.mxu0 0.0
      %1254 = vmatmul.mubr.f32.gmra.mrb[0].mxu0 %v1130
      %v1255 = vpop.f32.mrb[0].mxu0
      %v1256 = vadd.f32 %v1063, %v1255
      %v1257 = vpop.f32.mrb[0].mxu0
      %1258 = vmatprep.mubr.f32.mxu0 0.0
      %1259 = vmatmul.mubr.f32.gmra.mrb[0].mxu0 %v1133
      %v1260 = vpop.f32.mrb[0].mxu0
      %v1261 = vadd.f32 %v1068, %v1260
      %v1262 = vpop.f32.mrb[0].mxu0
      %1263 = vmatprep.mubr.f32.mxu0 0.0
      %1264 = vmatmul.mubr.f32.gmra.mrb[0].mxu0 %v1136
      %v1265 = vpop.f32.mrb[0].mxu0
      %v1266 = vadd.f32 %v1073, %v1265
      %v1267 = vpop.f32.mrb[0].mxu0
      %1268 = vmatprep.mubr.f32.mxu0 0.0
      %1269 = vmatmul.mubr.f32.gmra.mrb[0].mxu0 %v1139
      %v1270 = vpop.f32.mrb[0].mxu0
      %v1271 = vadd.f32 %v1078, %v1270
      %v1272 = vpop.f32.mrb[0].mxu0
      %1273 = vmatprep.mubr.f32.mxu0 0.0
      %1274 = vmatmul.mubr.f32.gmra.mrb[0].mxu0 %v1142
      %v1275 = vpop.f32.mrb[0].mxu0
      %v1276 = vadd.f32 %v1083, %v1275
      %v1277 = vpop.f32.mrb[0].mxu0
      %1278 = vmatprep.mubr.f32.mxu0 0.0
      %1279 = vmatmul.mubr.f32.gmra.mrb[0].mxu0 %v1145
      %v1280 = vpop.f32.mrb[0].mxu0
      %v1281 = vadd.f32 %v1088, %v1280
      %v1282 = vpop.f32.mrb[0].mxu0
      %1283 = vmatprep.mubr.f32.mxu0 0.0
      %1284 = vmatmul.mubr.f32.gmra.mrb[0].mxu0 %v1148
      %v1285 = vpop.f32.mrb[0].mxu0
      %v1286 = vadd.f32 %v1093, %v1285
      %v1287 = vpop.f32.mrb[0].mxu0
      %1288 = vmatprep.mubr.f32.mxu0 0.0
      %1289 = vmatmul.mubr.f32.gmra.mrb[0].mxu0 %v1151
      %v1290 = vpop.f32.mrb[0].mxu0
      %v1291 = vadd.f32 %v1098, %v1290
      %v1292 = vpop.f32.mrb[0].mxu0
      %1293 = vmatprep.mubr.f32.mxu0 0.0
      %1294 = vmatmul.mubr.f32.gmra.mrb[0].mxu0 %v1154
      %v1295 = vpop.f32.mrb[0].mxu0
      %v1296 = vadd.f32 %v1103, %v1295
      %v1297 = vpop.f32.mrb[0].mxu0
      %1298 = vmatprep.mubr.f32.mxu0 0.0
      %1299 = vmatmul.mubr.f32.gmra.mrb[0].mxu0 %v1157
      %v1300 = vpop.f32.mrb[0].mxu0
      %v1301 = vadd.f32 %v1108, %v1300
      %v1302 = vpop.f32.mrb[0].mxu0
      %1303 = vdwg.mxu0
      %1304 = vst.msk [vmem:[%s280] sm:$0xff] %vm917, %v1226
      %1305 = vst.msk [vmem:[%s280 + $0x8] sm:$0xff] %vm917, %v1231
      %1306 = vst.msk [vmem:[%s280 + $0x10] sm:$0xff] %vm917, %v1236
      %1307 = vst.msk [vmem:[%s280 + $0x18] sm:$0xff] %vm917, %v1241
      %1308 = vst.msk [vmem:[%s280 + $0x20] sm:$0xff] %vm917, %v1246
      %1309 = vst.msk [vmem:[%s280 + $0x28] sm:$0xff] %vm917, %v1251
      %1310 = vst.msk [vmem:[%s280 + $0x30] sm:$0xff] %vm917, %v1256
      %1311 = vst.msk [vmem:[%s280 + $0x38] sm:$0xff] %vm917, %v1261
      %1312 = vst.msk [vmem:[%s280 + $0x40] sm:$0xff] %vm917, %v1266
      %1313 = vst.msk [vmem:[%s280 + $0x48] sm:$0xff] %vm917, %v1271
      %1314 = vst.msk [vmem:[%s280 + $0x50] sm:$0xff] %vm917, %v1276
      %1315 = vst.msk [vmem:[%s280 + $0x58] sm:$0xff] %vm917, %v1281
      %1316 = vst.msk [vmem:[%s280 + $0x60] sm:$0xff] %vm917, %v1286
      %1317 = vst.msk [vmem:[%s280 + $0x68] sm:$0xff] %vm917, %v1291
      %1318 = vst.msk [vmem:[%s280 + $0x70] sm:$0xff] %vm917, %v1296
      %1319 = vst.msk [vmem:[%s280 + $0x78] sm:$0xff] %vm917, %v1301
      %s1320 = smul.u32 16, %s18
      %p1321 = scmp.lt.s32.totalorder %s1320, 31
      %s1322 = scalar_select %p1321, %s1320, 31
      %s1323 = smul.addr %s1322, 8
      %s1324 = scalar_lea.vmem %s7, %s1323
      // Predicated region
      $region49: #{quantile_network_forward.1} parent=47 // pred_check
        %p1325 = pneg %p188
      $region50: #{quantile_network_forward.1} parent=47 // pred_check_branch
        %1327 = sbr.rel (%p1325) target = $region52
      $region51: #{quantile_network_forward.1} parent=47 // pred_region
        %s1328 = smul.u32 16, %s18
      $region52: #{quantile_network_forward.1} parent=47 // pred_fallthru
        _
    $region48: #{quantile_network_forward.1} parent=5 // pred_fallthru
      _
    %p1329 = scmp.le.s32.totalorder 2, %s13
    // Predicated region
    $region53: #{quantile_network_forward.1} parent=5 // pred_check
      %p1330 = pneg %p1329
    $region54: #{quantile_network_forward.1} parent=5 // pred_check_branch
      %1332 = sbr.rel (%p1330) target = $region56
    $region55: #{quantile_network_forward.1} parent=5 // pred_region
      %s1333 = ssub.s32 %s13, 2
      // Predicated region
      $region57: #{quantile_network_forward.1} parent=55 // pred_check
        %p1334 = pneg %p194
      $region58: #{quantile_network_forward.1} parent=55 // pred_check_branch
        %1336 = sbr.rel (%p1334) target = $region60
      $region59: #{quantile_network_forward.1} parent=55 // pred_region
        %s1337 = smul.u32 16, %s19
        %p1338 = scmp.lt.s32.totalorder %s1337, 31
        %s1339 = scalar_select %p1338, %s1337, 31
        %s1340 = smul.addr %s1339, 8
        %s1341 = scalar_lea.vmem %s7, %s1340
      $region60: #{quantile_network_forward.1} parent=55 // pred_fallthru
        _
    $region56: #{quantile_network_forward.1} parent=5 // pred_fallthru
      _
  $region6: #{quantile_network_forward.1} parent=0 // loop_footer
    %s17 = sadd.s32 1, %s13
  $region7: #{quantile_network_forward.1} parent=0 // loop_footer_branch
    %12 = sbr.rel target = $region3
  $region8: #{quantile_network_forward.1} parent=0 // loop_exit
    _

</llo_original>
